<compile_context>
chip_gen: v7x
topology: tpu7x:2x2x1
jax: 0.10.0
libtpu: 0.0.40
codegen_flags: <defaults>
</compile_context>

<pallas_src>
import functools

import jax
import jax.numpy as jnp
from jax import lax
from jax.experimental import pallas as pl
from jax.experimental.pallas import tpu as pltpu

_EPS = 1e-8        # eps clamp on the row norm (like F.normalize / torch cos_sim)
_NEG_BIG = -1e30   # finite stand-in for -inf in the masked logsumexp


def _round_up(x: int, m: int) -> int:
    return ((x + m - 1) // m) * m


def _ntxent_kernel(x_row_ref, x_col_ref, x_pair_ref, out_ref, m_sc, l_sc, *,
                   n2, blk, inv_temp, apply_relu, mxu_dtype):
    i = pl.program_id(0)              # query-row block (parallel)
    j = pl.program_id(1)              # key-column block (reduction, last)
    n_key_blocks = pl.num_programs(1)

    @pl.when(j == 0)
    def _init():
        m_sc[...] = jnp.full(m_sc.shape, _NEG_BIG, dtype=jnp.float32)
        l_sc[...] = jnp.zeros(l_sc.shape, dtype=jnp.float32)

    def relu_normalize(v):
        v = v.astype(jnp.float32)
        if apply_relu:
            v = jnp.maximum(v, 0.0)
        ssq = jnp.sum(v * v, axis=-1, keepdims=True)
        # x / max(||x||, eps)  ==  x * rsqrt(max(||x||^2, eps^2))
        return v * lax.rsqrt(jnp.maximum(ssq, _EPS * _EPS))

    xq = relu_normalize(x_row_ref[...])        # (blk, Dp) normalized query rows
    xk = relu_normalize(x_col_ref[...])        # (blk, Dp) normalized key rows

    a = xq if mxu_dtype is None else xq.astype(mxu_dtype)
    b = xk if mxu_dtype is None else xk.astype(mxu_dtype)
    # cosine-similarity tile: contract the feature axes directly (no transpose).
    s = lax.dot_general(a, b, dimension_numbers=(((1,), (1,)), ((), ())),
                        preferred_element_type=jnp.float32) * inv_temp

    row_g = i * blk + lax.broadcasted_iota(jnp.int32, (blk, blk), 0)
    col_g = j * blk + lax.broadcasted_iota(jnp.int32, (blk, blk), 1)
    invalid = (row_g == col_g) | (col_g >= n2)   # diagonal + padded key columns
    s = jnp.where(invalid, _NEG_BIG, s)

    # online logsumexp update over key blocks.
    m_prev = m_sc[...]
    m_new = jnp.maximum(m_prev, jnp.max(s, axis=-1, keepdims=True))
    p = jnp.where(invalid, 0.0, jnp.exp(s - m_new))
    l_sc[...] = (jnp.exp(m_prev - m_new) * l_sc[...]
                 + jnp.sum(p, axis=-1, keepdims=True))
    m_sc[...] = m_new

    @pl.when(j == n_key_blocks - 1)
    def _finalize():
        desim = m_sc[...] + jnp.log(l_sc[...])                       # (blk, 1)
        xp = relu_normalize(x_pair_ref[...])                         # partners
        pos = jnp.sum(xq * xp, axis=-1, keepdims=True) * inv_temp    # (blk, 1)
        row_valid = (i * blk
                     + lax.broadcasted_iota(jnp.int32, (blk, 1), 0)) < n2
        partial = jnp.sum(jnp.where(row_valid, desim - pos, 0.0))
        out_ref[...] = jnp.full(out_ref.shape, partial, dtype=out_ref.dtype)


def ntxent_loss(x1, x2, *, temperature=1.0, apply_relu=True,
                block_size=256, mxu_dtype=None):
    """NT-Xent loss matching the PyTorch NTXentLoss.forward semantics.

    mxu_dtype: set to jnp.bfloat16 on v6e/v7x for ~2x MXU throughput (f32
    accumulation keeps the logsumexp stable); None keeps f32 MXU operands.
    """
    assert x1.shape == x2.shape and x1.ndim == 2
    n, d = x1.shape
    n2 = 2 * n

    # Concatenate in the wrapper (layout plumbing, not in-kernel).  x_pair holds
    # each row's positive partner so sim_pos becomes a row-wise dot.
    x_cat = jnp.concatenate([x1, x2], axis=0).astype(jnp.float32)
    x_pair = jnp.concatenate([x2, x1], axis=0).astype(jnp.float32)

    blk = _round_up(min(block_size, _round_up(n2, 8)), 8)
    rows_p = _round_up(n2, blk)
    d_p = _round_up(d, 128)   # lane-align features; zero-pad is norm/dot neutral

    pad = ((0, rows_p - n2), (0, d_p - d))
    x_cat = jnp.pad(x_cat, pad)
    x_pair = jnp.pad(x_pair, pad)

    n_blocks = rows_p // blk

    kernel = functools.partial(
        _ntxent_kernel, n2=n2, blk=blk, inv_temp=1.0 / float(temperature),
        apply_relu=apply_relu, mxu_dtype=mxu_dtype)

    partials = pl.pallas_call(
        kernel,
        out_shape=jax.ShapeDtypeStruct((n_blocks, 8, 128), jnp.float32),
        grid_spec=pltpu.PrefetchScalarGridSpec(
            num_scalar_prefetch=0,
            grid=(n_blocks, n_blocks),
            in_specs=[
                pl.BlockSpec((blk, d_p), lambda i, j: (i, 0)),   # query rows
                pl.BlockSpec((blk, d_p), lambda i, j: (j, 0)),   # key rows
                pl.BlockSpec((blk, d_p), lambda i, j: (i, 0)),   # positive pairs
            ],
            out_specs=pl.BlockSpec((1, 8, 128), lambda i, j: (i, 0, 0)),
            scratch_shapes=[pltpu.VMEM((blk, 1), jnp.float32),   # running max
                            pltpu.VMEM((blk, 1), jnp.float32)],  # running sum
        ),
        compiler_params=pltpu.CompilerParams(
            dimension_semantics=("parallel", "arbitrary")),
    )(x_cat, x_cat, x_pair)

    return jnp.sum(partials[:, 0, 0]) / n2


def ntxent_loss_ref(x1, x2, *, temperature=1.0, apply_relu=True):
    """Pure-JAX reference matching the PyTorch module semantics."""
    if apply_relu:
        x1 = jnp.maximum(x1, 0.0)
        x2 = jnp.maximum(x2, 0.0)
    x = jnp.concatenate([x1, x2], axis=0).astype(jnp.float32)
    n2 = x.shape[0]
    nn = n2 // 2
    xn = x / jnp.maximum(jnp.linalg.norm(x, axis=-1, keepdims=True), _EPS)
    sim_mat = (xn @ xn.T) / temperature
    # positive pair of row i is column (i + n) % 2n; those entries are exactly
    # the row-wise dot products of the two normalized halves.
    pos = jnp.sum(xn[:nn] * xn[nn:], axis=-1) / temperature
    sim = jnp.concatenate([pos, pos], axis=0)
    masked = jnp.where(jnp.eye(n2, dtype=bool), -jnp.inf, sim_mat)
    desim = jax.scipy.special.logsumexp(masked, axis=-1)
    return jnp.mean(-sim + desim)


if __name__ == "__main__":
    key = jax.random.PRNGKey(0)
    k1, k2 = jax.random.split(key)
    N, D = 8, 32  # batch of 8 paired views, 32-dim projection features
    x1 = jax.random.normal(k1, (N, D), dtype=jnp.float32)
    x2 = jax.random.normal(k2, (N, D), dtype=jnp.float32)

    loss = jax.block_until_ready(ntxent_loss(x1, x2))
    ref = jax.block_until_ready(ntxent_loss_ref(x1, x2))

    assert jnp.isfinite(loss), loss
    assert jnp.allclose(loss, ref, rtol=1e-4, atol=1e-5), (loss, ref)
    print("KERNEL_OK")
</pallas_src>

<mosaic_0001>
module attributes {stable_mosaic.version = 11 : i64} {
  func.func @_ntxent_kernel(%arg0: i32, %arg1: i32, %arg2: memref<16x128xf32, #tpu.memory_space<vmem>>, %arg3: memref<16x128xf32, #tpu.memory_space<vmem>>, %arg4: memref<16x128xf32, #tpu.memory_space<vmem>>, %arg5: memref<1x8x128xf32, #tpu.memory_space<vmem>>, %arg6: memref<16x1xf32, #tpu.memory_space<vmem>>, %arg7: memref<16x1xf32, #tpu.memory_space<vmem>>) attributes {dimension_semantics = [#tpu.dimension_semantics<parallel>, #tpu.dimension_semantics<arbitrary>], iteration_bounds = array<i64: 1, 1>, scalar_prefetch = 0 : i64, scratch_operands = 2 : i64, tpu.core_type = #tpu.core_type<tc>, window_params = [{transform_indices = @transform_0, window_bounds = array<i64: 16, 128>}, {transform_indices = @transform_1, window_bounds = array<i64: 16, 128>}, {transform_indices = @transform_2, window_bounds = array<i64: 16, 128>}, {transform_indices = @transform_3, window_bounds = array<i64: 1, 8, 128>}]} {
    %c0_i32 = arith.constant 0 : i32
    %0 = arith.cmpi eq, %arg1, %c0_i32 : i32
    %1 = arith.extui %0 : i1 to i32
    %c0_i32_0 = arith.constant 0 : i32
    %2 = arith.cmpi ne, %1, %c0_i32_0 : i32
    scf.if %2 {
      %cst_27 = arith.constant -1.000000e+30 : f32
      %63 = vector.broadcast %cst_27 : f32 to vector<16x1xf32>
      %c0_28 = arith.constant 0 : index
      %c0_29 = arith.constant 0 : index
      %64 = vector.load %arg6[%c0_28, %c0_29] : memref<16x1xf32, #tpu.memory_space<vmem>>, vector<16x1xf32>
      tpu.vector_store %arg6[%c0_28, %c0_29], %63 {strides = array<i32>} : memref<16x1xf32, #tpu.memory_space<vmem>>, vector<16x1xf32>,
      %cst_30 = arith.constant 0.000000e+00 : f32
      %65 = vector.broadcast %cst_30 : f32 to vector<16x1xf32>
      %c0_31 = arith.constant 0 : index
      %c0_32 = arith.constant 0 : index
      %66 = vector.load %arg7[%c0_31, %c0_32] : memref<16x1xf32, #tpu.memory_space<vmem>>, vector<16x1xf32>
      tpu.vector_store %arg7[%c0_31, %c0_32], %65 {strides = array<i32>} : memref<16x1xf32, #tpu.memory_space<vmem>>, vector<16x1xf32>,
    } else {
    }
    %c0 = arith.constant 0 : index
    %c0_1 = arith.constant 0 : index
    %3 = vector.load %arg2[%c0, %c0_1] : memref<16x128xf32, #tpu.memory_space<vmem>>, vector<16x128xf32>
    %cst = arith.constant 0.000000e+00 : f32
    %4 = vector.broadcast %cst : f32 to vector<16x128xf32>
    %5 = arith.maximumf %3, %4 : vector<16x128xf32>
    %6 = arith.mulf %5, %5 : vector<16x128xf32>
    %cst_2 = arith.constant dense<0.000000e+00> : vector<16xf32>
    %7 = vector.multi_reduction <add>, %6, %cst_2 [1] : vector<16x128xf32> to vector<16xf32>
    %8 = vector.shape_cast %7 : vector<16xf32> to vector<16x1xf32>
    %cst_3 = arith.constant 1.000000e-16 : f32
    %9 = vector.broadcast %cst_3 : f32 to vector<16x1xf32>
    %10 = arith.maximumf %8, %9 : vector<16x1xf32>
    %11 = math.rsqrt %10 : vector<16x1xf32>
    %12 = vector.broadcast %11 : vector<16x1xf32> to vector<16x128xf32>
    %13 = arith.mulf %5, %12 : vector<16x128xf32>
    %c0_4 = arith.constant 0 : index
    %c0_5 = arith.constant 0 : index
    %14 = vector.load %arg3[%c0_4, %c0_5] : memref<16x128xf32, #tpu.memory_space<vmem>>, vector<16x128xf32>
    %cst_6 = arith.constant 0.000000e+00 : f32
    %15 = vector.broadcast %cst_6 : f32 to vector<16x128xf32>
    %16 = arith.maximumf %14, %15 : vector<16x128xf32>
    %17 = arith.mulf %16, %16 : vector<16x128xf32>
    %cst_7 = arith.constant dense<0.000000e+00> : vector<16xf32>
    %18 = vector.multi_reduction <add>, %17, %cst_7 [1] : vector<16x128xf32> to vector<16xf32>
    %19 = vector.shape_cast %18 : vector<16xf32> to vector<16x1xf32>
    %cst_8 = arith.constant 1.000000e-16 : f32
    %20 = vector.broadcast %cst_8 : f32 to vector<16x1xf32>
    %21 = arith.maximumf %19, %20 : vector<16x1xf32>
    %22 = math.rsqrt %21 : vector<16x1xf32>
    %23 = vector.broadcast %22 : vector<16x1xf32> to vector<16x128xf32>
    %24 = arith.mulf %16, %23 : vector<16x128xf32>
    %cst_9 = arith.constant dense<0.000000e+00> : vector<16x16xf32>
    %25 = tpu.matmul %13, %24, %cst_9 {dimension_numbers = #tpu.dot_dimension_numbers<[1], [1], [0], [0], [0, 0, 1, 0], [], []>} : vector<16x128xf32>, vector<16x128xf32>, vector<16x16xf32> -> vector<16x16xf32>
    %cst_10 = arith.constant 1.000000e+00 : f32
    %26 = vector.broadcast %cst_10 : f32 to vector<16x16xf32>
    %27 = arith.mulf %25, %26 : vector<16x16xf32>
    %c16_i32 = arith.constant 16 : i32
    %28 = arith.muli %arg0, %c16_i32 : i32
    %29 = tpu.iota {dimensions = array<i32: 0>} : vector<16x16xi32>
    %30 = vector.broadcast %28 : i32 to vector<16x16xi32>
    %31 = arith.addi %30, %29 : vector<16x16xi32>
    %c16_i32_11 = arith.constant 16 : i32
    %32 = arith.muli %arg1, %c16_i32_11 : i32
    %33 = tpu.iota {dimensions = array<i32: 1>} : vector<16x16xi32>
    %34 = vector.broadcast %32 : i32 to vector<16x16xi32>
    %35 = arith.addi %34, %33 : vector<16x16xi32>
    %36 = arith.cmpi eq, %31, %35 : vector<16x16xi32>
    %c16_i32_12 = arith.constant 16 : i32
    %37 = vector.broadcast %c16_i32_12 : i32 to vector<16x16xi32>
    %38 = arith.cmpi sge, %35, %37 : vector<16x16xi32>
    %39 = arith.ori %36, %38 : vector<16x16xi1>
    %cst_13 = arith.constant -1.000000e+30 : f32
    %40 = vector.broadcast %cst_13 : f32 to vector<16x16xf32>
    %41 = arith.select %39, %40, %27 : vector<16x16xi1>, vector<16x16xf32>
    %c0_14 = arith.constant 0 : index
    %c0_15 = arith.constant 0 : index
    %42 = vector.load %arg6[%c0_14, %c0_15] : memref<16x1xf32, #tpu.memory_space<vmem>>, vector<16x1xf32>
    %cst_16 = arith.constant dense<0xFF800000> : vector<16xf32>
    %43 = vector.multi_reduction <maximumf>, %41, %cst_16 [1] : vector<16x16xf32> to vector<16xf32>
    %44 = vector.shape_cast %43 : vector<16xf32> to vector<16x1xf32>
    %45 = arith.maximumf %42, %44 : vector<16x1xf32>
    %46 = vector.broadcast %45 : vector<16x1xf32> to vector<16x16xf32>
    %47 = arith.subf %41, %46 : vector<16x16xf32>
    %48 = math.exp %47 : vector<16x16xf32>
    %cst_17 = arith.constant 0.000000e+00 : f32
    %49 = vector.broadcast %cst_17 : f32 to vector<16x16xf32>
    %50 = arith.select %39, %49, %48 : vector<16x16xi1>, vector<16x16xf32>
    %51 = arith.subf %42, %45 : vector<16x1xf32>
    %52 = math.exp %51 : vector<16x1xf32>
    %c0_18 = arith.constant 0 : index
    %c0_19 = arith.constant 0 : index
    %53 = vector.load %arg7[%c0_18, %c0_19] : memref<16x1xf32, #tpu.memory_space<vmem>>, vector<16x1xf32>
    %54 = arith.mulf %52, %53 : vector<16x1xf32>
    %cst_20 = arith.constant dense<0.000000e+00> : vector<16xf32>
    %55 = vector.multi_reduction <add>, %50, %cst_20 [1] : vector<16x16xf32> to vector<16xf32>
    %56 = vector.shape_cast %55 : vector<16xf32> to vector<16x1xf32>
    %57 = arith.addf %54, %56 : vector<16x1xf32>
    %c0_21 = arith.constant 0 : index
    %c0_22 = arith.constant 0 : index
    %58 = vector.load %arg7[%c0_21, %c0_22] : memref<16x1xf32, #tpu.memory_space<vmem>>, vector<16x1xf32>
    tpu.vector_store %arg7[%c0_21, %c0_22], %57 {strides = array<i32>} : memref<16x1xf32, #tpu.memory_space<vmem>>, vector<16x1xf32>,
    %c0_23 = arith.constant 0 : index
    %c0_24 = arith.constant 0 : index
    %59 = vector.load %arg6[%c0_23, %c0_24] : memref<16x1xf32, #tpu.memory_space<vmem>>, vector<16x1xf32>
    tpu.vector_store %arg6[%c0_23, %c0_24], %45 {strides = array<i32>} : memref<16x1xf32, #tpu.memory_space<vmem>>, vector<16x1xf32>,
    %c0_i32_25 = arith.constant 0 : i32
    %60 = arith.cmpi eq, %arg1, %c0_i32_25 : i32
    %61 = arith.extui %60 : i1 to i32
    %c0_i32_26 = arith.constant 0 : i32
    %62 = arith.cmpi ne, %61, %c0_i32_26 : i32
    scf.if %62 {
      %c0_27 = arith.constant 0 : index
      %c0_28 = arith.constant 0 : index
      %63 = vector.load %arg6[%c0_27, %c0_28] : memref<16x1xf32, #tpu.memory_space<vmem>>, vector<16x1xf32>
      %c0_29 = arith.constant 0 : index
      %c0_30 = arith.constant 0 : index
      %64 = vector.load %arg7[%c0_29, %c0_30] : memref<16x1xf32, #tpu.memory_space<vmem>>, vector<16x1xf32>
      %65 = math.log %64 : vector<16x1xf32>
      %66 = arith.addf %63, %65 : vector<16x1xf32>
      %c0_31 = arith.constant 0 : index
      %c0_32 = arith.constant 0 : index
      %67 = vector.load %arg4[%c0_31, %c0_32] : memref<16x128xf32, #tpu.memory_space<vmem>>, vector<16x128xf32>
      %cst_33 = arith.constant 0.000000e+00 : f32
      %68 = vector.broadcast %cst_33 : f32 to vector<16x128xf32>
      %69 = arith.maximumf %67, %68 : vector<16x128xf32>
      %70 = arith.mulf %69, %69 : vector<16x128xf32>
      %cst_34 = arith.constant dense<0.000000e+00> : vector<16xf32>
      %71 = vector.multi_reduction <add>, %70, %cst_34 [1] : vector<16x128xf32> to vector<16xf32>
      %72 = vector.shape_cast %71 : vector<16xf32> to vector<16x1xf32>
      %cst_35 = arith.constant 1.000000e-16 : f32
      %73 = vector.broadcast %cst_35 : f32 to vector<16x1xf32>
      %74 = arith.maximumf %72, %73 : vector<16x1xf32>
      %75 = math.rsqrt %74 : vector<16x1xf32>
      %76 = vector.broadcast %75 : vector<16x1xf32> to vector<16x128xf32>
      %77 = arith.mulf %69, %76 : vector<16x128xf32>
      %78 = arith.mulf %13, %77 : vector<16x128xf32>
      %cst_36 = arith.constant dense<0.000000e+00> : vector<16xf32>
      %79 = vector.multi_reduction <add>, %78, %cst_36 [1] : vector<16x128xf32> to vector<16xf32>
      %80 = vector.shape_cast %79 : vector<16xf32> to vector<16x1xf32>
      %cst_37 = arith.constant 1.000000e+00 : f32
      %81 = vector.broadcast %cst_37 : f32 to vector<16x1xf32>
      %82 = arith.mulf %80, %81 : vector<16x1xf32>
      %c16_i32_38 = arith.constant 16 : i32
      %83 = arith.muli %arg0, %c16_i32_38 : i32
      %84 = tpu.iota {dimensions = array<i32: 0>} : vector<16x1xi32>
      %85 = vector.broadcast %83 : i32 to vector<16x1xi32>
      %86 = arith.addi %85, %84 : vector<16x1xi32>
      %c16_i32_39 = arith.constant 16 : i32
      %87 = vector.broadcast %c16_i32_39 : i32 to vector<16x1xi32>
      %88 = arith.cmpi slt, %86, %87 : vector<16x1xi32>
      %89 = arith.subf %66, %82 : vector<16x1xf32>
      %cst_40 = arith.constant 0.000000e+00 : f32
      %90 = vector.broadcast %cst_40 : f32 to vector<16x1xf32>
      %91 = arith.select %88, %89, %90 : vector<16x1xi1>, vector<16x1xf32>
      %92 = vector.shape_cast %91 : vector<16x1xf32> to vector<1x16x1xf32>
      %cst_41 = arith.constant dense<0.000000e+00> : vector<1xf32>
      %93 = vector.multi_reduction <add>, %92, %cst_41 [1, 2] : vector<1x16x1xf32> to vector<1xf32>
      %94 = vector.shape_cast %93 : vector<1xf32> to vector<1x1x1xf32>
      %95 = vector.extract %94[0, 0, 0] : f32 from vector<1x1x1xf32>
      %96 = vector.broadcast %95 : f32 to vector<1x8x128xf32>
      %c0_42 = arith.constant 0 : index
      %c0_43 = arith.constant 0 : index
      %c0_44 = arith.constant 0 : index
      %97 = vector.load %arg5[%c0_42, %c0_43, %c0_44] : memref<1x8x128xf32, #tpu.memory_space<vmem>>, vector<1x8x128xf32>
      tpu.vector_store %arg5[%c0_42, %c0_43, %c0_44], %96 {strides = array<i32>} : memref<1x8x128xf32, #tpu.memory_space<vmem>>, vector<1x8x128xf32>,
    } else {
    }
    return
  }
  func.func @transform_0(%arg0: i32, %arg1: i32) -> (i32, i32) {
    %c0_i32 = arith.constant 0 : i32
    %c0_i32_0 = arith.constant 0 : i32
    return %arg0, %c0_i32 : i32, i32
  }
  func.func @transform_1(%arg0: i32, %arg1: i32) -> (i32, i32) {
    %c0_i32 = arith.constant 0 : i32
    %c0_i32_0 = arith.constant 0 : i32
    return %arg1, %c0_i32 : i32, i32
  }
  func.func @transform_2(%arg0: i32, %arg1: i32) -> (i32, i32) {
    %c0_i32 = arith.constant 0 : i32
    %c0_i32_0 = arith.constant 0 : i32
    return %arg0, %c0_i32 : i32, i32
  }
  func.func @transform_3(%arg0: i32, %arg1: i32) -> (i32, i32, i32) {
    %c0_i32 = arith.constant 0 : i32
    %c0_i32_0 = arith.constant 0 : i32
    %c0_i32_1 = arith.constant 0 : i32
    return %arg0, %c0_i32, %c0_i32_0 : i32, i32, i32
  }
}

</mosaic_0001>

<llo_original>
// kernel: tpu_custom_call.1
$region0: #{tpu_custom_call.1}
  #allocation0 [shape = 'u32[]', space=smem, size = 0x4, offset = 0x4, fixed_abs, tag = 'smem constant byte address 0x4 - core index']
  #allocation1 [shape = 'u32[144,128]{1,0:T(1,128)}', space=vmem, size = 0x12000, scoped, tag = 'internal scratch']
  #allocation2 [shape = 'f32[16,1]{1,0:T(8,128)}', space=vmem, size = 0x2000, scoped, tag = 'scratch operand']
  #allocation3 [shape = 'f32[16,1]{1,0:T(8,128)}', space=vmem, size = 0x2000, scoped, tag = 'scratch operand']
  %s0 = inlined_call_operand.hbm [shape: f32[16,128], index: 0, kind: input, shape index: {}]
  %s1 = inlined_call_operand.hbm [shape: f32[16,128], index: 1, kind: input, shape index: {}]
  %s2 = inlined_call_operand.hbm [shape: f32[16,128], index: 2, kind: input, shape index: {}]
  %s3 = inlined_call_operand.hbm [shape: f32[1,8,128], index: 3, kind: output, shape index: {}]
  %s4 = sld [smem:[#allocation0]]
  $region42: #{tpu_custom_call.1} parent=0
    _
  %s6 = ssub.s32 1, %s4
  %s7 = scalar_select 0, %s6, %s4
  $region1: #{tpu_custom_call.1} parent=0
    #allocation4 [shape = 'u8[8192]{0}', space=vmem, size = 0x2000, scoped, tag = 'input window, operand 0, single buffered']
    #allocation5 [shape = 's32[1]{0}', space=sflag, size = 0x4, scoped, tag = 'scoped memory for tpu_custom_call.1']
    #allocation6 [shape = 's32[1]{0}', space=sflag, size = 0x4, scoped, tag = 'scoped memory for tpu_custom_call.1']
    #allocation7 [shape = 'u8[8192]{0}', space=vmem, size = 0x2000, scoped, tag = 'input window, operand 1, single buffered']
    #allocation8 [shape = 's32[1]{0}', space=sflag, size = 0x4, scoped, tag = 'scoped memory for tpu_custom_call.1']
    #allocation9 [shape = 'u8[8192]{0}', space=vmem, size = 0x2000, scoped, tag = 'input window, operand 2, single buffered']
    #allocation10 [shape = 'u8[4096]{0}', space=vmem, size = 0x1000, scoped, tag = 'output window, operand 0, single buffered']
    %8 = vsyncpa [#allocation5], 0
    %9 = vsyncpa [#allocation8], 0
    %10 = vsyncpa [#allocation6], 0
    // Predicated region
    $region2: #{tpu_custom_call.1} parent=1 // pred_check
      _
    $region3: #{tpu_custom_call.1} parent=1 // pred_check_branch
      %12 = sbr.rel (0) target = $region5
    $region4: #{tpu_custom_call.1} parent=1 // pred_region
      %s14 = ssub.s32 256, 256
      %15 = vsyncadd [#allocation5], %s14
      %s16 = sshll.u32 [#allocation4], 4
      %s17 = int_to_ptr.vmem [resolvable:$true] %s16
      %22 = dma.hbm_to_vmem [thread:$0]  %s0, 256, %s17, [#allocation5], 128, 128, 8
    $region5: #{tpu_custom_call.1} parent=1 // pred_fallthru
      _
    // Predicated region
    $region6: #{tpu_custom_call.1} parent=1 // pred_check
      _
    $region7: #{tpu_custom_call.1} parent=1 // pred_check_branch
      %24 = sbr.rel (0) target = $region9
    $region8: #{tpu_custom_call.1} parent=1 // pred_region
      %s26 = ssub.s32 256, 256
      %27 = vsyncadd [#allocation8], %s26
      %s28 = sshll.u32 [#allocation7], 4
      %s29 = int_to_ptr.vmem [resolvable:$true] %s28
      %34 = dma.hbm_to_vmem [thread:$0]  %s1, 256, %s29, [#allocation8], 128, 128, 8
    $region9: #{tpu_custom_call.1} parent=1 // pred_fallthru
      _
    // Predicated region
    $region10: #{tpu_custom_call.1} parent=1 // pred_check
      _
    $region11: #{tpu_custom_call.1} parent=1 // pred_check_branch
      %36 = sbr.rel (0) target = $region13
    $region12: #{tpu_custom_call.1} parent=1 // pred_region
      %s38 = ssub.s32 256, 256
      %39 = vsyncadd [#allocation8], %s38
      %s40 = sshll.u32 [#allocation9], 4
      %s41 = int_to_ptr.vmem [resolvable:$true] %s40
      %46 = dma.hbm_to_vmem [thread:$0]  %s2, 256, %s41, [#allocation8], 128, 128, 8
    $region13: #{tpu_custom_call.1} parent=1 // pred_fallthru
      _
    // Predicated region
    $region14: #{tpu_custom_call.1} parent=1 // pred_check
      _
    $region15: #{tpu_custom_call.1} parent=1 // pred_check_branch
      %48 = sbr.rel (0) target = $region17
    $region16: #{tpu_custom_call.1} parent=1 // pred_region
      %49 = dma.done [#allocation5], 256
    $region17: #{tpu_custom_call.1} parent=1 // pred_fallthru
      _
    // Predicated region
    $region18: #{tpu_custom_call.1} parent=1 // pred_check
      _
    $region19: #{tpu_custom_call.1} parent=1 // pred_check_branch
      %51 = sbr.rel (0) target = $region21
    $region20: #{tpu_custom_call.1} parent=1 // pred_region
      %52 = dma.done [#allocation8], 256
    $region21: #{tpu_custom_call.1} parent=1 // pred_fallthru
      _
    // Predicated region
    $region22: #{tpu_custom_call.1} parent=1 // pred_check
      _
    $region23: #{tpu_custom_call.1} parent=1 // pred_check_branch
      %54 = sbr.rel (0) target = $region25
    $region24: #{tpu_custom_call.1} parent=1 // pred_region
      %55 = dma.done [#allocation8], 256
    $region25: #{tpu_custom_call.1} parent=1 // pred_fallthru
      _
    %p56 = scmp.eq.s32.totalorder 0, 0
    // Predicated region
    $region26: #{tpu_custom_call.1} parent=1 // pred_check
      %p57 = pneg %p56
    $region27: #{tpu_custom_call.1} parent=1 // pred_check_branch
      %59 = sbr.rel (%p57) target = $region29
    $region28: #{tpu_custom_call.1} parent=1 // pred_region
      %vm60 = vcmask 7168
      %61 = vst.msk [vmem:[#allocation2] sm:$0xff] %vm60, -1e+30
      %62 = vst.msk [vmem:[#allocation2 + $0x8] sm:$0xff] %vm60, -1e+30
      %63 = vst.msk [vmem:[#allocation3] sm:$0xff] %vm60, 0.0
      %64 = vst.msk [vmem:[#allocation3 + $0x8] sm:$0xff] %vm60, 0.0
    $region29: #{tpu_custom_call.1} parent=1 // pred_fallthru
      _
    %v65 = vld [vmem:[#allocation4] sm:$0xff]
    %v66 = vld [vmem:[#allocation4 + $0x8] sm:$0xff]
    %v67 = vmax.f32 %v65, 0.0
    %v68 = vmax.f32 %v66, 0.0
    %v69 = vmul.f32 %v67, %v67
    %v70 = vmul.f32 %v68, %v68
    %71 = vadd.xlane.f32.xlu0 %v69
    %v72 = vpop.xlane.xlu0 %71
    %73 = vadd.xlane.f32.xlu0 %v70
    %v74 = vpop.xlane.xlu0 %73
    %v75 = vmax.f32 %v72, 1e-16
    %v76 = vmax.f32 %v74, 1e-16
    %v77 = vrsqrt.pop %v75
    %v78 = vrsqrt.pop %v76
    %v79 = vmul.f32 %v67, %v77
    %v80 = vmul.f32 %v68, %v78
    %v81 = vld [vmem:[#allocation7] sm:$0xff]
    %v82 = vld [vmem:[#allocation7 + $0x8] sm:$0xff]
    %v83 = vmax.f32 %v81, 0.0
    %v84 = vmax.f32 %v82, 0.0
    %v85 = vmul.f32 %v83, %v83
    %v86 = vmul.f32 %v84, %v84
    %87 = vadd.xlane.f32.xlu0 %v85
    %v88 = vpop.xlane.xlu0 %87
    %89 = vadd.xlane.f32.xlu0 %v86
    %v90 = vpop.xlane.xlu0 %89
    %v91 = vmax.f32 %v88, 1e-16
    %v92 = vmax.f32 %v90, 1e-16
    %v93 = vrsqrt.pop %v91
    %v94 = vrsqrt.pop %v92
    %v95 = vmul.f32 %v83, %v93
    %v96 = vmul.f32 %v84, %v94
    %97 = vmatprep.subr.mxu0 0.0
    %98 = vmatpush1.xpose.msra.mxu0 %v95
    %99 = vmatprep.subr.mxu0 0.0
    %100 = vmatpush1.xpose.msra.mxu0 %v96
    %101 = vmatprep.subr.mxu0 0.0
    %102 = vmatpush1.xpose.msra.mxu0 0.0
    %103 = vmatprep.subr.mxu0 0.0
    %104 = vmatpush1.xpose.msra.mxu0 0.0
    %105 = vmatprep.subr.mxu0 0.0
    %106 = vmatpush1.xpose.msra.mxu0 0.0
    %107 = vmatprep.subr.mxu0 0.0
    %108 = vmatpush1.xpose.msra.mxu0 0.0
    %109 = vmatprep.subr.mxu0 0.0
    %110 = vmatpush1.xpose.msra.mxu0 0.0
    %111 = vmatprep.subr.mxu0 0.0
    %112 = vmatpush1.xpose.msra.mxu0 0.0
    %113 = vmatprep.subr.mxu0 0.0
    %114 = vmatpush1.xpose.msra.mxu0 0.0
    %115 = vmatprep.subr.mxu0 0.0
    %116 = vmatpush1.xpose.msra.mxu0 0.0
    %117 = vmatprep.subr.mxu0 0.0
    %118 = vmatpush1.xpose.msra.mxu0 0.0
    %119 = vmatprep.subr.mxu0 0.0
    %120 = vmatpush1.xpose.msra.mxu0 0.0
    %121 = vmatprep.subr.mxu0 0.0
    %122 = vmatpush1.xpose.msra.mxu0 0.0
    %123 = vmatprep.subr.mxu0 0.0
    %124 = vmatpush1.xpose.msra.mxu0 0.0
    %125 = vmatprep.subr.mxu0 0.0
    %126 = vmatpush1.xpose.msra.mxu0 0.0
    %127 = vmatprep.subr.mxu0 0.0
    %128 = vmatpush1.xpose.msra.mxu0 0.0
    %129 = vmatprep.subr.mxu0 0.0
    %130 = vmatpush1.xpose.msra.mxu0 0.0
    %131 = vmatprep.subr.mxu0 0.0
    %132 = vmatpush1.xpose.msra.mxu0 0.0
    %133 = vmatprep.subr.mxu0 0.0
    %134 = vmatpush1.xpose.msra.mxu0 0.0
    %135 = vmatprep.subr.mxu0 0.0
    %136 = vmatpush1.xpose.msra.mxu0 0.0
    %137 = vmatprep.subr.mxu0 0.0
    %138 = vmatpush1.xpose.msra.mxu0 0.0
    %139 = vmatprep.subr.mxu0 0.0
    %140 = vmatpush1.xpose.msra.mxu0 0.0
    %141 = vmatprep.subr.mxu0 0.0
    %142 = vmatpush1.xpose.msra.mxu0 0.0
    %143 = vmatprep.subr.mxu0 0.0
    %144 = vmatpush1.xpose.msra.mxu0 0.0
    %145 = vmatprep.subr.mxu0 0.0
    %146 = vmatpush1.xpose.msra.mxu0 0.0
    %147 = vmatprep.subr.mxu0 0.0
    %148 = vmatpush1.xpose.msra.mxu0 0.0
    %149 = vmatprep.subr.mxu0 0.0
    %150 = vmatpush1.xpose.msra.mxu0 0.0
    %151 = vmatprep.subr.mxu0 0.0
    %152 = vmatpush1.xpose.msra.mxu0 0.0
    %153 = vmatprep.subr.mxu0 0.0
    %154 = vmatpush1.xpose.msra.mxu0 0.0
    %155 = vmatprep.subr.mxu0 0.0
    %156 = vmatpush1.xpose.msra.mxu0 0.0
    %157 = vmatprep.subr.mxu0 0.0
    %158 = vmatpush1.xpose.msra.mxu0 0.0
    %159 = vmatprep.subr.mxu0 0.0
    %160 = vmatpush1.xpose.msra.mxu0 0.0
    %161 = vmatprep.mubr.f32.mxu0 0.0
    %162 = vmatmul.mubr.f32.gmra.mrb[0].mxu0 %v79
    %v163 = vpop.f32.mrb[0].mxu0
    %v164 = vadd.f32 0.0, %v163
    %v165 = vpop.f32.mrb[0].mxu0
    %166 = vmatprep.mubr.f32.mxu0 0.0
    %167 = vmatmul.mubr.f32.gmra.mrb[0].mxu0 %v80
    %v168 = vpop.f32.mrb[0].mxu0
    %v169 = vadd.f32 0.0, %v168
    %v170 = vpop.f32.mrb[0].mxu0
    %171 = vdwg.mxu0
    %s172 = smul.u32 0, 16
    %v173 = vlaneseq
    %v174 = vshrl.u32 %v173, 7
    %v175 = vadd.s32 %v174, 8
    %v176 = vstv %s172
    %v177 = vadd.s32 %v176, %v174
    %v178 = vadd.s32 %v176, %v175
    %s179 = smul.u32 0, 16
    %v180 = vlaneseq
    %v181 = vand.u32 %v180, 127
    %v182 = vstv %s179
    %v183 = vadd.s32 %v182, %v181
    %vm184 = vcmp.eq.s32.totalorder %v177, %v183
    %vm185 = vcmp.eq.s32.totalorder %v178, %v183
    %vm186 = vcmp.ge.s32.totalorder %v183, 16
    %vm187 = vmor %vm184, %vm186
    %vm188 = vmor %vm185, %vm186
    %v189 = vsel %vm187, -1e+30, %v164
    %v190 = vsel %vm188, -1e+30, %v169
    %v191 = vld [vmem:[#allocation2] sm:$0xff]
    %v192 = vld [vmem:[#allocation2 + $0x8] sm:$0xff]
    %vm193 = vcmask 130048
    %v194 = vsel %vm193, %v189, -inf
    %195 = vmax.xlane.f32.xlu0 %v194
    %v196 = vpop.xlane.xlu0 %195
    %v197 = vsel %vm193, %v190, -inf
    %198 = vmax.xlane.f32.xlu0 %v197
    %v199 = vpop.xlane.xlu0 %198
    %v200 = vmax.f32 %v191, %v196
    %v201 = vmax.f32 %v192, %v199
    %203 = vset.pattern.permute.xlu0 0
    %204 = vperm.xlu0 %203, %v200
    %v205 = vpop.permute.xlu0 %204
    %208 = vset.pattern.permute.xlu0 0
    %209 = vperm.xlu0 %208, %v201
    %v210 = vpop.permute.xlu0 %209
    %v212 = vsub.f32 %v189, %v205
    %v213 = vsub.f32 %v190, %v210
    %v214 = vmul.f32 %v212, 1.442695
    %v215 = vpow.pop %v214
    %v216 = vmul.f32 %v213, 1.442695
    %v217 = vpow.pop %v216
    %v218 = vsel %vm187, 0.0, %v215
    %v219 = vsel %vm188, 0.0, %v217
    %v220 = vsub.f32 %v191, %v200
    %v221 = vsub.f32 %v192, %v201
    %v222 = vmul.f32 %v220, 1.442695
    %v223 = vpow.pop %v222
    %v224 = vmul.f32 %v221, 1.442695
    %v225 = vpow.pop %v224
    %v226 = vld [vmem:[#allocation3] sm:$0xff]
    %v227 = vld [vmem:[#allocation3 + $0x8] sm:$0xff]
    %v228 = vmul.f32 %v223, %v226
    %v229 = vmul.f32 %v225, %v227
    %v230 = vsel %vm193, %v218, 0.0
    %231 = vadd.xlane.f32.xlu0 %v230
    %v232 = vpop.xlane.xlu0 %231
    %v233 = vsel %vm193, %v219, 0.0
    %234 = vadd.xlane.f32.xlu0 %v233
    %v235 = vpop.xlane.xlu0 %234
    %v236 = vadd.f32 %v228, %v232
    %v237 = vadd.f32 %v229, %v235
    %vm238 = vcmask 7168
    %239 = vst.msk [vmem:[#allocation3] sm:$0xff] %vm238, %v236
    %240 = vst.msk [vmem:[#allocation3 + $0x8] sm:$0xff] %vm238, %v237
    %241 = vst.msk [vmem:[#allocation2] sm:$0xff] %vm238, %v200
    %242 = vst.msk [vmem:[#allocation2 + $0x8] sm:$0xff] %vm238, %v201
    // Predicated region
    $region30: #{tpu_custom_call.1} parent=1 // pred_check
      %p243 = pneg %p56
    $region31: #{tpu_custom_call.1} parent=1 // pred_check_branch
      %245 = sbr.rel (%p243) target = $region33
    $region32: #{tpu_custom_call.1} parent=1 // pred_region
      %v246 = vld [vmem:[#allocation2] sm:$0xff]
      %v247 = vld [vmem:[#allocation2 + $0x8] sm:$0xff]
      %v248 = vld [vmem:[#allocation3] sm:$0xff]
      %v249 = vld [vmem:[#allocation3 + $0x8] sm:$0xff]
      %v250 = vlog2.pop %v248
      %v251 = vmul.f32 %v250, 0.6931472
      %v252 = vlog2.pop %v249
      %v253 = vmul.f32 %v252, 0.6931472
      %v254 = vadd.f32 %v246, %v251
      %v255 = vadd.f32 %v247, %v253
      %v256 = vld [vmem:[#allocation9] sm:$0xff]
      %v257 = vld [vmem:[#allocation9 + $0x8] sm:$0xff]
      %v258 = vmax.f32 %v256, 0.0
      %v259 = vmax.f32 %v257, 0.0
      %v260 = vmul.f32 %v258, %v258
      %v261 = vmul.f32 %v259, %v259
      %262 = vadd.xlane.f32.xlu0 %v260
      %v263 = vpop.xlane.xlu0 %262
      %264 = vadd.xlane.f32.xlu0 %v261
      %v265 = vpop.xlane.xlu0 %264
      %v266 = vmax.f32 %v263, 1e-16
      %v267 = vmax.f32 %v265, 1e-16
      %v268 = vrsqrt.pop %v266
      %v269 = vrsqrt.pop %v267
      %v270 = vmul.f32 %v258, %v268
      %v271 = vmul.f32 %v259, %v269
      %v272 = vmul.f32 %v79, %v270
      %v273 = vmul.f32 %v80, %v271
      %274 = vadd.xlane.f32.xlu0 %v272
      %v275 = vpop.xlane.xlu0 %274
      %276 = vadd.xlane.f32.xlu0 %v273
      %v277 = vpop.xlane.xlu0 %276
      %vm278 = vcmp.lt.s32.totalorder %v177, 16
      %vm279 = vcmp.lt.s32.totalorder %v178, 16
      %v280 = vsub.f32 %v254, %v275
      %v281 = vsub.f32 %v255, %v277
      %v282 = vsel %vm278, %v280, 0.0
      %v283 = vsel %vm279, %v281, 0.0
      %v284 = vsel %vm238, %v282, 0.0
      %v285 = vsel %vm238, %v283, 0.0
      %v286 = vadd.f32 %v284, %v285
      %287 = vadd.xlane.f32.xlu0 %v286
      %v288 = vpop.xlane.xlu0 %287
      %v289 = vrot.slane %v288, 4
      %v290 = vadd.f32 %v288, %v289
      %v291 = vrot.slane %v290, 2
      %v292 = vadd.f32 %v290, %v291
      %v293 = vrot.slane %v292, 1
      %v294 = vadd.f32 %v292, %v293
      %s295 = vtos %v294
      %v296 = vstv %s295
      %297 = vst [vmem:[#allocation10] sm:$0xff] %v296
    $region33: #{tpu_custom_call.1} parent=1 // pred_fallthru
      _
    // Predicated region
    $region34: #{tpu_custom_call.1} parent=1 // pred_check
      _
    $region35: #{tpu_custom_call.1} parent=1 // pred_check_branch
      %299 = sbr.rel (0) target = $region37
    $region36: #{tpu_custom_call.1} parent=1 // pred_region
      %s301 = ssub.s32 128, 128
      %302 = vsyncadd [#allocation6], %s301
      %s304 = sshll.u32 [#allocation10], 4
      %s305 = int_to_ptr.vmem [resolvable:$true] %s304
      %307 = dma.vmem_to_hbm [thread:$0]  %s305, 128, %s3, [#allocation6]
    $region37: #{tpu_custom_call.1} parent=1 // pred_fallthru
      _
    // Predicated region
    $region38: #{tpu_custom_call.1} parent=1 // pred_check
      _
    $region39: #{tpu_custom_call.1} parent=1 // pred_check_branch
      %309 = sbr.rel (0) target = $region41
    $region40: #{tpu_custom_call.1} parent=1 // pred_region
      %310 = dma.done [#allocation6], 128
    $region41: #{tpu_custom_call.1} parent=1 // pred_fallthru
      _
    %311 = vsyncpa [#allocation5], 1
    %312 = vsyncpa [#allocation8], 1
    %313 = vsyncpa [#allocation6], 1

</llo_original>
